<compile_context>
chip_gen: v7x
topology: tpu7x:2x2x1
jax: 0.10.0
libtpu: 0.0.40
codegen_flags: <defaults>
</compile_context>

<pallas_src>
import functools

import jax
import jax.numpy as jnp
from jax import lax
from jax.experimental import pallas as pl
from jax.experimental.pallas import tpu as pltpu

NUM_CLASSES = 8
OUTPUT_INDICES = (1, 3, 5)


def multiclass_binary_kernel(x_ref, w_ref, b_ref, mask_ref, o_ref, acc_ref,
                             *, tk, w_resident):
    """grid = (batch_tiles [parallel], k_tiles [arbitrary, reduction-last])."""
    k = pl.program_id(1)

    # ---- init accumulator at the start of the reduction axis ----
    @pl.when(k == 0)
    def _():
        acc_ref[...] = jnp.zeros_like(acc_ref)

    # ---- inner model: partial matmul on the MXU, f32 accumulation ----
    if w_resident:
        # Whole (padded) weight lives in VMEM; slice the K-chunk in place so the
        # weight is DMA'd from HBM once, with no per-grid-step weight DMA.
        off = pl.multiple_of(k * tk, 128)
        w_tile = w_ref[pl.ds(off, tk), :]
    else:
        w_tile = w_ref[...]
    acc_ref[...] += jnp.dot(x_ref[...], w_tile, preferred_element_type=jnp.float32)

    # ---- epilogue on the last K step: softmax -> select -> [log(1-p), log p] ----
    @pl.when(k == pl.num_programs(1) - 1)
    def _():
        logits = acc_ref[...] + b_ref[...]                    # [TB, C] f32
        m = jnp.max(logits, axis=-1, keepdims=True)
        e = jnp.exp(logits - m)                               # EUP
        s_all = jnp.sum(e, axis=-1, keepdims=True)            # [TB, 1]
        s_sel = jnp.sum(e * mask_ref[...], axis=-1, keepdims=True)
        s_unsel = s_all - s_sel
        log_all = jnp.log(s_all)                              # EUP logs, no divide
        log_p = jnp.log(s_sel) - log_all                      # == log(sum probs[sel])
        log_1mp = jnp.log(s_unsel) - log_all                  # == log(1 - p), stable
        # Single full-block store (no lane-axis concatenate / partial stores).
        col = lax.broadcasted_iota(jnp.int32, o_ref.shape, 1)
        o_ref[...] = jnp.where(col == 0, log_1mp, log_p)


def _vmem_capacity_bytes():
    """Trace-time VMEM capacity; conservative (v7x-sized) default if unknown."""
    try:
        info = pltpu.get_tpu_info()
        cap = getattr(info, "vmem_capacity_bytes", None)
        if cap:
            return int(cap)
    except Exception:
        pass
    return 64 * 1024 * 1024


def _plan(B, Dp, C, itemsize, vmem_cap):
    """Generation-aware (TB, TK, buffers, vmem_limit, w_resident) selection.

    All footprints below are lane-padding-aware: the C=8 axis of the weight
    slice / accumulator / output pads to 128 lanes.
    """
    LANE = 128
    big_vmem = vmem_cap >= 100 * 1024 * 1024        # v5e/v6e: 128 MiB physical
    if big_vmem:
        vmem_limit = 96 * 1024 * 1024               # leave headroom out of 128 MiB
        x_budget = 64 * 1024 * 1024                 # multi-buffered x stream budget
        tb_cap = 2048
        buffers = 3                                  # deeper pipeline on x stream
    else:                                            # v7x-class: 64 MiB, 2 TCs
        vmem_limit = 48 * 1024 * 1024
        x_budget = 24 * 1024 * 1024
        tb_cap = 1536
        buffers = 2
    vmem_limit = min(vmem_limit, vmem_cap * 7 // 8)

    # K tile: largest 128-multiple dividing padded D.
    TK = 128
    for cand in (4096, 2048, 1024, 512, 256, 128):
        if Dp % cand == 0:
            TK = cand
            break

    # Weight residency: padded (->128 lanes), double-buffered footprint.
    w_padded_bytes = 2 * Dp * LANE * itemsize
    w_resident = w_padded_bytes <= (8 if big_vmem else 4) * 1024 * 1024

    # Batch tile sized against the x-stream budget (buffers x TB x TK x itemsize);
    # acc (TB x 128 x 4) and out (2 x TB x 128 x 4) fit easily in the remaining
    # vmem_limit headroom for all TB <= 2048.
    per_row_x = buffers * TK * itemsize
    TB = min(tb_cap, max(8, (x_budget // per_row_x) // 8 * 8))
    if B < 8:
        TB = B                                      # full batch dim (legal block)
    else:
        TB = min(TB, (B // 8) * 8)                  # ragged tail via cdiv grid

    # v7x: the "parallel" batch axis is what gets sharded across the 2 TCs --
    # make the batch-tile count >= 2 and even so neither core idles.
    if (not big_vmem) and B >= 16:
        n_b = -(-B // TB)
        if n_b < 2 or (n_b % 2 == 1):
            target = max(2, ((n_b + 1) // 2) * 2)
            TB = max(8, ((-(-B // target)) + 7) // 8 * 8)

    return TB, TK, buffers, vmem_limit, w_resident


def _x_block_spec(shape, index_map, buffers):
    """x-stream BlockSpec, optionally >2-deep buffered (v5e/v6e headroom)."""
    if buffers > 2:
        try:
            return pl.BlockSpec(shape, index_map, pipeline_mode=pl.Buffered(buffers))
        except TypeError:
            pass  # older API without pipeline_mode: default 2-deep buffering
    return pl.BlockSpec(shape, index_map)


def multiclass_binary_forward(x_nchw, w, b, output_indices):
    B = int(x_nchw.shape[0])
    D = 1
    for s in x_nchw.shape[1:]:
        D *= int(s)
    C = int(w.shape[1])

    # No dtype upcast: stream x in its native dtype (bf16 halves HBM traffic).
    # NOTE: w is cast to x's dtype so the MXU sees uniform operands; for bf16 x
    # this intentionally downcasts f32 weights (standard inference practice).
    x2d = x_nchw.reshape(B, D)
    w2d = w.astype(x2d.dtype)
    b2d = b.reshape(1, C).astype(jnp.float32)
    idx = jnp.asarray(output_indices)
    # .add (not .set) so duplicate indices double-count exactly like torch's
    # output[..., indices].sum().
    mask = jnp.zeros((1, C), jnp.float32).at[0, idx].add(1.0)

    # Zero-pad K up to a multiple of 128: exact (padded columns/rows contribute
    # nothing) and keeps the K axis 128-aligned and pipelineable.
    Dp = ((D + 127) // 128) * 128
    if Dp != D:
        x2d = jnp.pad(x2d, ((0, 0), (0, Dp - D)))
        w2d = jnp.pad(w2d, ((0, Dp - D), (0, 0)))

    itemsize = jnp.dtype(x2d.dtype).itemsize
    vmem_cap = _vmem_capacity_bytes()
    TB, TK, buffers, vmem_limit, w_resident = _plan(B, Dp, C, itemsize, vmem_cap)
    grid = (pl.cdiv(B, TB), Dp // TK)

    x_spec = _x_block_spec((TB, TK), lambda i, k: (i, k), buffers)
    if w_resident:
        w_spec = pl.BlockSpec((Dp, C), lambda i, k: (0, 0))   # fully resident
    else:
        w_spec = pl.BlockSpec((TK, C), lambda i, k: (k, 0))   # streamed K-slice

    kernel = functools.partial(multiclass_binary_kernel, tk=TK, w_resident=w_resident)

    cost = pl.CostEstimate(
        flops=2 * B * Dp * C,
        transcendentals=B * (C + 3),
        bytes_accessed=B * Dp * itemsize + Dp * C * itemsize + B * 2 * 4 + 2 * C * 4,
    )

    return pl.pallas_call(
        kernel,
        out_shape=jax.ShapeDtypeStruct((B, 2), jnp.float32),
        grid_spec=pltpu.PrefetchScalarGridSpec(
            num_scalar_prefetch=0,
            grid=grid,
            in_specs=[
                x_spec,                                        # activations (streamed)
                w_spec,                                        # weights
                pl.BlockSpec((1, C), lambda i, k: (0, 0)),     # bias (resident)
                pl.BlockSpec((1, C), lambda i, k: (0, 0)),     # index mask (resident)
            ],
            out_specs=pl.BlockSpec((TB, 2), lambda i, k: (i, 0)),
            scratch_shapes=[pltpu.VMEM((TB, C), jnp.float32)],  # logits accumulator
        ),
        compiler_params=pltpu.CompilerParams(
            dimension_semantics=("parallel", "arbitrary"),
            vmem_limit_bytes=int(vmem_limit),
        ),
        cost_estimate=cost,
    )(x2d, w2d, b2d, mask)


def _reference(x_nchw, w, b, output_indices):
    B = x_nchw.shape[0]
    x2d = x_nchw.reshape(B, -1).astype(jnp.float32)
    logits = x2d @ w.astype(jnp.float32) + b[None, :]
    probs = jax.nn.softmax(logits, axis=-1)
    p = probs[..., jnp.asarray(output_indices)].sum(axis=-1, keepdims=True)
    out = jnp.concatenate([1.0 - p, p], axis=-1)
    return jnp.log(out)


if __name__ == "__main__":
    key = jax.random.PRNGKey(0)
    kx, kw, kb, kx2, kw2, kb2 = jax.random.split(key, 6)

    # Case 1: canonical small shape (B=2, C=4, 16x16 -> D=1024, 128-aligned).
    B, Cc, H, W = 2, 4, 16, 16
    D = Cc * H * W
    x = jax.random.normal(kx, (B, Cc, H, W), dtype=jnp.float32)
    w = jax.random.normal(kw, (D, NUM_CLASSES), dtype=jnp.float32) * 0.05
    b = jax.random.normal(kb, (NUM_CLASSES,), dtype=jnp.float32) * 0.1

    out = jax.block_until_ready(multiclass_binary_forward(x, w, b, OUTPUT_INDICES))
    ref = _reference(x, w, b, OUTPUT_INDICES)
    assert out.shape == (B, 2)
    assert jnp.allclose(out, ref, atol=1e-3, rtol=1e-3), (out, ref)

    # Case 2: ragged batch (B % TB != 0) and D % 128 != 0 -- exercises the
    # zero-padded K path, multi-step reduction, and discarded tail output rows.
    B2, Cc2, H2, W2 = 10, 3, 15, 15
    D2 = Cc2 * H2 * W2
    x2 = jax.random.normal(kx2, (B2, Cc2, H2, W2), dtype=jnp.float32)
    w2 = jax.random.normal(kw2, (D2, NUM_CLASSES), dtype=jnp.float32) * 0.05
    b2 = jax.random.normal(kb2, (NUM_CLASSES,), dtype=jnp.float32) * 0.1

    out2 = jax.block_until_ready(multiclass_binary_forward(x2, w2, b2, OUTPUT_INDICES))
    ref2 = _reference(x2, w2, b2, OUTPUT_INDICES)
    assert out2.shape == (B2, 2)
    assert jnp.allclose(out2, ref2, atol=1e-3, rtol=1e-3), (out2, ref2)

    print("KERNEL_OK")
</pallas_src>

<mosaic_0001>
module attributes {stable_mosaic.version = 11 : i64} {
  func.func @multiclass_binary_kernel(%arg0: i32, %arg1: i32, %arg2: memref<2x1024xf32, #tpu.memory_space<vmem>>, %arg3: memref<1024x8xf32, #tpu.memory_space<vmem>>, %arg4: memref<1x8xf32, #tpu.memory_space<vmem>>, %arg5: memref<1x8xf32, #tpu.memory_space<vmem>>, %arg6: memref<2x2xf32, #tpu.memory_space<vmem>>, %arg7: memref<2x8xf32, #tpu.memory_space<vmem>>) attributes {dimension_semantics = [#tpu.dimension_semantics<parallel>, #tpu.dimension_semantics<arbitrary>], iteration_bounds = array<i64: 1, 1>, scalar_prefetch = 0 : i64, scratch_operands = 1 : i64, tpu.core_type = #tpu.core_type<tc>, window_params = [{transform_indices = @transform_0, window_bounds = array<i64: 2, 1024>}, {pipeline_mode = #tpu.pipeline_mode<synchronous>, transform_indices = @transform_1, window_bounds = array<i64: 1024, 8>}, {pipeline_mode = #tpu.pipeline_mode<synchronous>, transform_indices = @transform_2, window_bounds = array<i64: 1, 8>}, {pipeline_mode = #tpu.pipeline_mode<synchronous>, transform_indices = @transform_3, window_bounds = array<i64: 1, 8>}, {transform_indices = @transform_4, window_bounds = array<i64: 2, 2>}]} {
    %c0_i32 = arith.constant 0 : i32
    %0 = arith.cmpi eq, %arg1, %c0_i32 : i32
    %1 = arith.extui %0 : i1 to i32
    %c0_i32_0 = arith.constant 0 : i32
    %2 = arith.cmpi ne, %1, %c0_i32_0 : i32
    scf.if %2 {
      %cst_9 = arith.constant 0.000000e+00 : f32
      %15 = vector.broadcast %cst_9 : f32 to vector<2x8xf32>
      %c0_10 = arith.constant 0 : index
      %c0_11 = arith.constant 0 : index
      %16 = vector.load %arg7[%c0_10, %c0_11] : memref<2x8xf32, #tpu.memory_space<vmem>>, vector<2x8xf32>
      tpu.vector_store %arg7[%c0_10, %c0_11], %15 {strides = array<i32>} : memref<2x8xf32, #tpu.memory_space<vmem>>, vector<2x8xf32>,
    } else {
    }
    %c1024_i32 = arith.constant 1024 : i32
    %3 = arith.muli %arg1, %c1024_i32 : i32
    %4 = tpu.assume_multiple %3, 128 : i32
    %5 = arith.index_cast %4 : i32 to index
    %c0 = arith.constant 0 : index
    %6 = vector.load %arg3[%5, %c0] : memref<1024x8xf32, #tpu.memory_space<vmem>>, vector<1024x8xf32>
    %c0_1 = arith.constant 0 : index
    %c0_2 = arith.constant 0 : index
    %7 = vector.load %arg7[%c0_1, %c0_2] : memref<2x8xf32, #tpu.memory_space<vmem>>, vector<2x8xf32>
    %c0_3 = arith.constant 0 : index
    %c0_4 = arith.constant 0 : index
    %8 = vector.load %arg2[%c0_3, %c0_4] : memref<2x1024xf32, #tpu.memory_space<vmem>>, vector<2x1024xf32>
    %cst = arith.constant dense<0.000000e+00> : vector<2x8xf32>
    %9 = tpu.matmul %8, %6, %cst {dimension_numbers = #tpu.dot_dimension_numbers<[1], [0], [0], [1], [0, 0, 1, 1], [], []>} : vector<2x1024xf32>, vector<1024x8xf32>, vector<2x8xf32> -> vector<2x8xf32>
    %10 = arith.addf %7, %9 : vector<2x8xf32>
    %c0_5 = arith.constant 0 : index
    %c0_6 = arith.constant 0 : index
    %11 = vector.load %arg7[%c0_5, %c0_6] : memref<2x8xf32, #tpu.memory_space<vmem>>, vector<2x8xf32>
    tpu.vector_store %arg7[%c0_5, %c0_6], %10 {strides = array<i32>} : memref<2x8xf32, #tpu.memory_space<vmem>>, vector<2x8xf32>,
    %c0_i32_7 = arith.constant 0 : i32
    %12 = arith.cmpi eq, %arg1, %c0_i32_7 : i32
    %13 = arith.extui %12 : i1 to i32
    %c0_i32_8 = arith.constant 0 : i32
    %14 = arith.cmpi ne, %13, %c0_i32_8 : i32
    scf.if %14 {
      %c0_9 = arith.constant 0 : index
      %c0_10 = arith.constant 0 : index
      %15 = vector.load %arg7[%c0_9, %c0_10] : memref<2x8xf32, #tpu.memory_space<vmem>>, vector<2x8xf32>
      %c0_11 = arith.constant 0 : index
      %c0_12 = arith.constant 0 : index
      %16 = vector.load %arg4[%c0_11, %c0_12] : memref<1x8xf32, #tpu.memory_space<vmem>>, vector<1x8xf32>
      %17 = vector.broadcast %16 : vector<1x8xf32> to vector<2x8xf32>
      %18 = arith.addf %15, %17 : vector<2x8xf32>
      %cst_13 = arith.constant dense<0xFF800000> : vector<2xf32>
      %19 = vector.multi_reduction <maximumf>, %18, %cst_13 [1] : vector<2x8xf32> to vector<2xf32>
      %20 = vector.shape_cast %19 : vector<2xf32> to vector<2x1xf32>
      %21 = vector.broadcast %20 : vector<2x1xf32> to vector<2x8xf32>
      %22 = arith.subf %18, %21 : vector<2x8xf32>
      %23 = math.exp %22 : vector<2x8xf32>
      %cst_14 = arith.constant dense<0.000000e+00> : vector<2xf32>
      %24 = vector.multi_reduction <add>, %23, %cst_14 [1] : vector<2x8xf32> to vector<2xf32>
      %25 = vector.shape_cast %24 : vector<2xf32> to vector<2x1xf32>
      %c0_15 = arith.constant 0 : index
      %c0_16 = arith.constant 0 : index
      %26 = vector.load %arg5[%c0_15, %c0_16] : memref<1x8xf32, #tpu.memory_space<vmem>>, vector<1x8xf32>
      %27 = vector.broadcast %26 : vector<1x8xf32> to vector<2x8xf32>
      %28 = arith.mulf %23, %27 : vector<2x8xf32>
      %cst_17 = arith.constant dense<0.000000e+00> : vector<2xf32>
      %29 = vector.multi_reduction <add>, %28, %cst_17 [1] : vector<2x8xf32> to vector<2xf32>
      %30 = vector.shape_cast %29 : vector<2xf32> to vector<2x1xf32>
      %31 = arith.subf %25, %30 : vector<2x1xf32>
      %32 = math.log %25 : vector<2x1xf32>
      %33 = math.log %30 : vector<2x1xf32>
      %34 = arith.subf %33, %32 : vector<2x1xf32>
      %35 = math.log %31 : vector<2x1xf32>
      %36 = arith.subf %35, %32 : vector<2x1xf32>
      %37 = tpu.iota {dimensions = array<i32: 1>} : vector<2x2xi32>
      %c0_i32_18 = arith.constant 0 : i32
      %38 = vector.broadcast %c0_i32_18 : i32 to vector<2x2xi32>
      %39 = arith.cmpi eq, %37, %38 : vector<2x2xi32>
      %40 = vector.shape_cast %36 : vector<2x1xf32> to vector<2x1xf32>
      %41 = vector.broadcast %40 : vector<2x1xf32> to vector<2x2xf32>
      %42 = vector.shape_cast %34 : vector<2x1xf32> to vector<2x1xf32>
      %43 = vector.broadcast %42 : vector<2x1xf32> to vector<2x2xf32>
      %44 = arith.select %39, %41, %43 : vector<2x2xi1>, vector<2x2xf32>
      %c0_19 = arith.constant 0 : index
      %c0_20 = arith.constant 0 : index
      %45 = vector.load %arg6[%c0_19, %c0_20] : memref<2x2xf32, #tpu.memory_space<vmem>>, vector<2x2xf32>
      tpu.vector_store %arg6[%c0_19, %c0_20], %44 {strides = array<i32>} : memref<2x2xf32, #tpu.memory_space<vmem>>, vector<2x2xf32>,
    } else {
    }
    return
  }
  func.func @transform_0(%arg0: i32, %arg1: i32) -> (i32, i32) {
    %c0_i32 = arith.constant 0 : i32
    return %arg0, %arg1 : i32, i32
  }
  func.func @transform_1(%arg0: i32, %arg1: i32) -> (i32, i32) {
    %c0_i32 = arith.constant 0 : i32
    %c0_i32_0 = arith.constant 0 : i32
    %c0_i32_1 = arith.constant 0 : i32
    return %c0_i32, %c0_i32_0 : i32, i32
  }
  func.func @transform_2(%arg0: i32, %arg1: i32) -> (i32, i32) {
    %c0_i32 = arith.constant 0 : i32
    %c0_i32_0 = arith.constant 0 : i32
    %c0_i32_1 = arith.constant 0 : i32
    return %c0_i32, %c0_i32_0 : i32, i32
  }
  func.func @transform_3(%arg0: i32, %arg1: i32) -> (i32, i32) {
    %c0_i32 = arith.constant 0 : i32
    %c0_i32_0 = arith.constant 0 : i32
    %c0_i32_1 = arith.constant 0 : i32
    return %c0_i32, %c0_i32_0 : i32, i32
  }
  func.func @transform_4(%arg0: i32, %arg1: i32) -> (i32, i32) {
    %c0_i32 = arith.constant 0 : i32
    %c0_i32_0 = arith.constant 0 : i32
    return %arg0, %c0_i32 : i32, i32
  }
}

</mosaic_0001>

<llo_original>
// kernel: tpu_custom_call.1
$region0: #{tpu_custom_call.1}
  #allocation0 [shape = 'u32[]', space=smem, size = 0x4, offset = 0x4, fixed_abs, tag = 'smem constant byte address 0x4 - core index']
  #allocation1 [shape = 'u32[144,128]{1,0:T(1,128)}', space=vmem, size = 0x12000, scoped, tag = 'internal scratch']
  #allocation2 [shape = 'f32[2,8]{1,0:T(2,128)}', space=vmem, size = 0x400, scoped, tag = 'scratch operand']
  %s0 = inlined_call_operand.vmem [shape: f32[2,1024], index: 0, kind: input, shape index: {}]
  %s1 = inlined_call_operand.vmem [shape: f32[1024,8], index: 1, kind: input, shape index: {}]
  %s2 = inlined_call_operand.vmem [shape: f32[1,8], index: 2, kind: input, shape index: {}]
  %s3 = inlined_call_operand.vmem [shape: f32[1,8], index: 3, kind: input, shape index: {}]
  %s4 = inlined_call_operand.hbm [shape: f32[2,2], index: 4, kind: output, shape index: {}]
  %s5 = sld [smem:[#allocation0]]
  $region34: #{tpu_custom_call.1} parent=0
    _
  %s7 = ssub.s32 1, %s5
  %s8 = scalar_select 0, %s7, %s5
  $region1: #{tpu_custom_call.1} parent=0
    #allocation3 [shape = 'u8[1024]{0}', space=vmem, size = 0x400, scoped, tag = 'output window, operand 0, single buffered']
    #allocation4 [shape = 's32[1]{0}', space=sflag, size = 0x4, scoped, tag = 'scoped memory for tpu_custom_call.1']
    %9 = vsyncpa [#allocation4], 0
    // Predicated region
    $region2: #{tpu_custom_call.1} parent=1 // pred_check
      _
    $region3: #{tpu_custom_call.1} parent=1 // pred_check_branch
      %11 = sbr.rel (0) target = $region5
    $region4: #{tpu_custom_call.1} parent=1 // pred_region
      _
    $region5: #{tpu_custom_call.1} parent=1 // pred_fallthru
      _
    // Predicated region
    $region6: #{tpu_custom_call.1} parent=1 // pred_check
      _
    $region7: #{tpu_custom_call.1} parent=1 // pred_check_branch
      %13 = sbr.rel (0) target = $region9
    $region8: #{tpu_custom_call.1} parent=1 // pred_region
      _
    $region9: #{tpu_custom_call.1} parent=1 // pred_fallthru
      _
    // Predicated region
    $region10: #{tpu_custom_call.1} parent=1 // pred_check
      _
    $region11: #{tpu_custom_call.1} parent=1 // pred_check_branch
      %15 = sbr.rel (0) target = $region13
    $region12: #{tpu_custom_call.1} parent=1 // pred_region
      _
    $region13: #{tpu_custom_call.1} parent=1 // pred_fallthru
      _
    // Predicated region
    $region14: #{tpu_custom_call.1} parent=1 // pred_check
      _
    $region15: #{tpu_custom_call.1} parent=1 // pred_check_branch
      %17 = sbr.rel (0) target = $region17
    $region16: #{tpu_custom_call.1} parent=1 // pred_region
      _
    $region17: #{tpu_custom_call.1} parent=1 // pred_fallthru
      _
    %p18 = scmp.eq.s32.totalorder 0, 0
    // Predicated region
    $region18: #{tpu_custom_call.1} parent=1 // pred_check
      %p19 = pneg %p18
    $region19: #{tpu_custom_call.1} parent=1 // pred_check_branch
      %21 = sbr.rel (%p19) target = $region21
    $region20: #{tpu_custom_call.1} parent=1 // pred_region
      %vm22 = vcmask 58368
      %23 = vst.msk [vmem:[#allocation2] sm:$0x3] %vm22, 0.0
    $region21: #{tpu_custom_call.1} parent=1 // pred_fallthru
      _
    %s24 = smul.u32 0, 1024
    %s25 = scalar_lea.vmem %s1, %s24
    %v26 = vld [vmem:[%s25] sm:$0xff]
    %v27 = vld [vmem:[%s25 + $0x8] sm:$0xff]
    %v28 = vld [vmem:[%s25 + $0x10] sm:$0xff]
    %v29 = vld [vmem:[%s25 + $0x18] sm:$0xff]
    %v30 = vld [vmem:[%s25 + $0x20] sm:$0xff]
    %v31 = vld [vmem:[%s25 + $0x28] sm:$0xff]
    %v32 = vld [vmem:[%s25 + $0x30] sm:$0xff]
    %v33 = vld [vmem:[%s25 + $0x38] sm:$0xff]
    %v34 = vld [vmem:[%s25 + $0x40] sm:$0xff]
    %v35 = vld [vmem:[%s25 + $0x48] sm:$0xff]
    %v36 = vld [vmem:[%s25 + $0x50] sm:$0xff]
    %v37 = vld [vmem:[%s25 + $0x58] sm:$0xff]
    %v38 = vld [vmem:[%s25 + $0x60] sm:$0xff]
    %v39 = vld [vmem:[%s25 + $0x68] sm:$0xff]
    %v40 = vld [vmem:[%s25 + $0x70] sm:$0xff]
    %v41 = vld [vmem:[%s25 + $0x78] sm:$0xff]
    %v42 = vld [vmem:[%s25 + $0x80] sm:$0xff]
    %v43 = vld [vmem:[%s25 + $0x88] sm:$0xff]
    %v44 = vld [vmem:[%s25 + $0x90] sm:$0xff]
    %v45 = vld [vmem:[%s25 + $0x98] sm:$0xff]
    %v46 = vld [vmem:[%s25 + $0xa0] sm:$0xff]
    %v47 = vld [vmem:[%s25 + $0xa8] sm:$0xff]
    %v48 = vld [vmem:[%s25 + $0xb0] sm:$0xff]
    %v49 = vld [vmem:[%s25 + $0xb8] sm:$0xff]
    %v50 = vld [vmem:[%s25 + $0xc0] sm:$0xff]
    %v51 = vld [vmem:[%s25 + $0xc8] sm:$0xff]
    %v52 = vld [vmem:[%s25 + $0xd0] sm:$0xff]
    %v53 = vld [vmem:[%s25 + $0xd8] sm:$0xff]
    %v54 = vld [vmem:[%s25 + $0xe0] sm:$0xff]
    %v55 = vld [vmem:[%s25 + $0xe8] sm:$0xff]
    %v56 = vld [vmem:[%s25 + $0xf0] sm:$0xff]
    %v57 = vld [vmem:[%s25 + $0xf8] sm:$0xff]
    %v58 = vld [vmem:[%s25 + $0x100] sm:$0xff]
    %v59 = vld [vmem:[%s25 + $0x108] sm:$0xff]
    %v60 = vld [vmem:[%s25 + $0x110] sm:$0xff]
    %v61 = vld [vmem:[%s25 + $0x118] sm:$0xff]
    %v62 = vld [vmem:[%s25 + $0x120] sm:$0xff]
    %v63 = vld [vmem:[%s25 + $0x128] sm:$0xff]
    %v64 = vld [vmem:[%s25 + $0x130] sm:$0xff]
    %v65 = vld [vmem:[%s25 + $0x138] sm:$0xff]
    %v66 = vld [vmem:[%s25 + $0x140] sm:$0xff]
    %v67 = vld [vmem:[%s25 + $0x148] sm:$0xff]
    %v68 = vld [vmem:[%s25 + $0x150] sm:$0xff]
    %v69 = vld [vmem:[%s25 + $0x158] sm:$0xff]
    %v70 = vld [vmem:[%s25 + $0x160] sm:$0xff]
    %v71 = vld [vmem:[%s25 + $0x168] sm:$0xff]
    %v72 = vld [vmem:[%s25 + $0x170] sm:$0xff]
    %v73 = vld [vmem:[%s25 + $0x178] sm:$0xff]
    %v74 = vld [vmem:[%s25 + $0x180] sm:$0xff]
    %v75 = vld [vmem:[%s25 + $0x188] sm:$0xff]
    %v76 = vld [vmem:[%s25 + $0x190] sm:$0xff]
    %v77 = vld [vmem:[%s25 + $0x198] sm:$0xff]
    %v78 = vld [vmem:[%s25 + $0x1a0] sm:$0xff]
    %v79 = vld [vmem:[%s25 + $0x1a8] sm:$0xff]
    %v80 = vld [vmem:[%s25 + $0x1b0] sm:$0xff]
    %v81 = vld [vmem:[%s25 + $0x1b8] sm:$0xff]
    %v82 = vld [vmem:[%s25 + $0x1c0] sm:$0xff]
    %v83 = vld [vmem:[%s25 + $0x1c8] sm:$0xff]
    %v84 = vld [vmem:[%s25 + $0x1d0] sm:$0xff]
    %v85 = vld [vmem:[%s25 + $0x1d8] sm:$0xff]
    %v86 = vld [vmem:[%s25 + $0x1e0] sm:$0xff]
    %v87 = vld [vmem:[%s25 + $0x1e8] sm:$0xff]
    %v88 = vld [vmem:[%s25 + $0x1f0] sm:$0xff]
    %v89 = vld [vmem:[%s25 + $0x1f8] sm:$0xff]
    %v90 = vld [vmem:[%s25 + $0x200] sm:$0xff]
    %v91 = vld [vmem:[%s25 + $0x208] sm:$0xff]
    %v92 = vld [vmem:[%s25 + $0x210] sm:$0xff]
    %v93 = vld [vmem:[%s25 + $0x218] sm:$0xff]
    %v94 = vld [vmem:[%s25 + $0x220] sm:$0xff]
    %v95 = vld [vmem:[%s25 + $0x228] sm:$0xff]
    %v96 = vld [vmem:[%s25 + $0x230] sm:$0xff]
    %v97 = vld [vmem:[%s25 + $0x238] sm:$0xff]
    %v98 = vld [vmem:[%s25 + $0x240] sm:$0xff]
    %v99 = vld [vmem:[%s25 + $0x248] sm:$0xff]
    %v100 = vld [vmem:[%s25 + $0x250] sm:$0xff]
    %v101 = vld [vmem:[%s25 + $0x258] sm:$0xff]
    %v102 = vld [vmem:[%s25 + $0x260] sm:$0xff]
    %v103 = vld [vmem:[%s25 + $0x268] sm:$0xff]
    %v104 = vld [vmem:[%s25 + $0x270] sm:$0xff]
    %v105 = vld [vmem:[%s25 + $0x278] sm:$0xff]
    %v106 = vld [vmem:[%s25 + $0x280] sm:$0xff]
    %v107 = vld [vmem:[%s25 + $0x288] sm:$0xff]
    %v108 = vld [vmem:[%s25 + $0x290] sm:$0xff]
    %v109 = vld [vmem:[%s25 + $0x298] sm:$0xff]
    %v110 = vld [vmem:[%s25 + $0x2a0] sm:$0xff]
    %v111 = vld [vmem:[%s25 + $0x2a8] sm:$0xff]
    %v112 = vld [vmem:[%s25 + $0x2b0] sm:$0xff]
    %v113 = vld [vmem:[%s25 + $0x2b8] sm:$0xff]
    %v114 = vld [vmem:[%s25 + $0x2c0] sm:$0xff]
    %v115 = vld [vmem:[%s25 + $0x2c8] sm:$0xff]
    %v116 = vld [vmem:[%s25 + $0x2d0] sm:$0xff]
    %v117 = vld [vmem:[%s25 + $0x2d8] sm:$0xff]
    %v118 = vld [vmem:[%s25 + $0x2e0] sm:$0xff]
    %v119 = vld [vmem:[%s25 + $0x2e8] sm:$0xff]
    %v120 = vld [vmem:[%s25 + $0x2f0] sm:$0xff]
    %v121 = vld [vmem:[%s25 + $0x2f8] sm:$0xff]
    %v122 = vld [vmem:[%s25 + $0x300] sm:$0xff]
    %v123 = vld [vmem:[%s25 + $0x308] sm:$0xff]
    %v124 = vld [vmem:[%s25 + $0x310] sm:$0xff]
    %v125 = vld [vmem:[%s25 + $0x318] sm:$0xff]
    %v126 = vld [vmem:[%s25 + $0x320] sm:$0xff]
    %v127 = vld [vmem:[%s25 + $0x328] sm:$0xff]
    %v128 = vld [vmem:[%s25 + $0x330] sm:$0xff]
    %v129 = vld [vmem:[%s25 + $0x338] sm:$0xff]
    %v130 = vld [vmem:[%s25 + $0x340] sm:$0xff]
    %v131 = vld [vmem:[%s25 + $0x348] sm:$0xff]
    %v132 = vld [vmem:[%s25 + $0x350] sm:$0xff]
    %v133 = vld [vmem:[%s25 + $0x358] sm:$0xff]
    %v134 = vld [vmem:[%s25 + $0x360] sm:$0xff]
    %v135 = vld [vmem:[%s25 + $0x368] sm:$0xff]
    %v136 = vld [vmem:[%s25 + $0x370] sm:$0xff]
    %v137 = vld [vmem:[%s25 + $0x378] sm:$0xff]
    %v138 = vld [vmem:[%s25 + $0x380] sm:$0xff]
    %v139 = vld [vmem:[%s25 + $0x388] sm:$0xff]
    %v140 = vld [vmem:[%s25 + $0x390] sm:$0xff]
    %v141 = vld [vmem:[%s25 + $0x398] sm:$0xff]
    %v142 = vld [vmem:[%s25 + $0x3a0] sm:$0xff]
    %v143 = vld [vmem:[%s25 + $0x3a8] sm:$0xff]
    %v144 = vld [vmem:[%s25 + $0x3b0] sm:$0xff]
    %v145 = vld [vmem:[%s25 + $0x3b8] sm:$0xff]
    %v146 = vld [vmem:[%s25 + $0x3c0] sm:$0xff]
    %v147 = vld [vmem:[%s25 + $0x3c8] sm:$0xff]
    %v148 = vld [vmem:[%s25 + $0x3d0] sm:$0xff]
    %v149 = vld [vmem:[%s25 + $0x3d8] sm:$0xff]
    %v150 = vld [vmem:[%s25 + $0x3e0] sm:$0xff]
    %v151 = vld [vmem:[%s25 + $0x3e8] sm:$0xff]
    %v152 = vld [vmem:[%s25 + $0x3f0] sm:$0xff]
    %v153 = vld [vmem:[%s25 + $0x3f8] sm:$0xff]
    %v154 = vld [vmem:[#allocation2] sm:$0x3]
    %v155 = vld [vmem:[%s0] sm:$0xff]
    %v156 = vld [vmem:[%s0 + $0x8] sm:$0xff]
    %v159 = vcombine.high %v155, %v155
    %v161 = vunpack.c.l.s4 1983009808
    %v162 = vunpack.c.0.s8 %v161
    %v163 = vlaneseq
    %v164 = vshrl.u32 %v163, 7
    %v165 = vsub.s32 %v162, %v164
    %v166 = vrot.slane %v155, %v165
    %v168 = vunpack.c.l.s4 1983009808
    %v169 = vunpack.c.0.s8 %v168
    %v170 = vlaneseq
    %v171 = vshrl.u32 %v170, 7
    %v172 = vsub.s32 %v169, %v171
    %v173 = vrot.slane %v159, %v172
    %v174 = vcombine.high %v166, %v166
    %v175 = vcombine.high %v173, %v173
    %v176 = vcombine.high %v156, %v156
    %v178 = vunpack.c.l.s4 1983009808
    %v179 = vunpack.c.0.s8 %v178
    %v180 = vlaneseq
    %v181 = vshrl.u32 %v180, 7
    %v182 = vsub.s32 %v179, %v181
    %v183 = vrot.slane %v156, %v182
    %v185 = vunpack.c.l.s4 1983009808
    %v186 = vunpack.c.0.s8 %v185
    %v187 = vlaneseq
    %v188 = vshrl.u32 %v187, 7
    %v189 = vsub.s32 %v186, %v188
    %v190 = vrot.slane %v176, %v189
    %v191 = vcombine.high %v183, %v183
    %v192 = vcombine.high %v190, %v190
    %201 = vmatprep.subr.mxu0 0.0
    %202 = vmatpush1.msra.mxu0 %v26
    %203 = vmatprep.subr.mxu0 0.0
    %204 = vmatpush1.msra.mxu0 %v27
    %205 = vmatprep.subr.mxu0 0.0
    %206 = vmatpush1.msra.mxu0 %v28
    %207 = vmatprep.subr.mxu0 0.0
    %208 = vmatpush1.msra.mxu0 %v29
    %209 = vmatprep.subr.mxu0 0.0
    %210 = vmatpush1.msra.mxu0 %v30
    %211 = vmatprep.subr.mxu0 0.0
    %212 = vmatpush1.msra.mxu0 %v31
    %213 = vmatprep.subr.mxu0 0.0
    %214 = vmatpush1.msra.mxu0 %v32
    %215 = vmatprep.subr.mxu0 0.0
    %216 = vmatpush1.msra.mxu0 %v33
    %217 = vmatprep.subr.mxu0 0.0
    %218 = vmatpush1.msra.mxu0 %v34
    %219 = vmatprep.subr.mxu0 0.0
    %220 = vmatpush1.msra.mxu0 %v35
    %221 = vmatprep.subr.mxu0 0.0
    %222 = vmatpush1.msra.mxu0 %v36
    %223 = vmatprep.subr.mxu0 0.0
    %224 = vmatpush1.msra.mxu0 %v37
    %225 = vmatprep.subr.mxu0 0.0
    %226 = vmatpush1.msra.mxu0 %v38
    %227 = vmatprep.subr.mxu0 0.0
    %228 = vmatpush1.msra.mxu0 %v39
    %229 = vmatprep.subr.mxu0 0.0
    %230 = vmatpush1.msra.mxu0 %v40
    %231 = vmatprep.subr.mxu0 0.0
    %232 = vmatpush1.msra.mxu0 %v41
    %233 = vmatprep.subr.mxu0 0.0
    %234 = vmatpush1.msra.mxu0 %v42
    %235 = vmatprep.subr.mxu0 0.0
    %236 = vmatpush1.msra.mxu0 %v43
    %237 = vmatprep.subr.mxu0 0.0
    %238 = vmatpush1.msra.mxu0 %v44
    %239 = vmatprep.subr.mxu0 0.0
    %240 = vmatpush1.msra.mxu0 %v45
    %241 = vmatprep.subr.mxu0 0.0
    %242 = vmatpush1.msra.mxu0 %v46
    %243 = vmatprep.subr.mxu0 0.0
    %244 = vmatpush1.msra.mxu0 %v47
    %245 = vmatprep.subr.mxu0 0.0
    %246 = vmatpush1.msra.mxu0 %v48
    %247 = vmatprep.subr.mxu0 0.0
    %248 = vmatpush1.msra.mxu0 %v49
    %249 = vmatprep.subr.mxu0 0.0
    %250 = vmatpush1.msra.mxu0 %v50
    %251 = vmatprep.subr.mxu0 0.0
    %252 = vmatpush1.msra.mxu0 %v51
    %253 = vmatprep.subr.mxu0 0.0
    %254 = vmatpush1.msra.mxu0 %v52
    %255 = vmatprep.subr.mxu0 0.0
    %256 = vmatpush1.msra.mxu0 %v53
    %257 = vmatprep.subr.mxu0 0.0
    %258 = vmatpush1.msra.mxu0 %v54
    %259 = vmatprep.subr.mxu0 0.0
    %260 = vmatpush1.msra.mxu0 %v55
    %261 = vmatprep.subr.mxu0 0.0
    %262 = vmatpush1.msra.mxu0 %v56
    %263 = vmatprep.subr.mxu0 0.0
    %264 = vmatpush1.msra.mxu0 %v57
    %265 = vmatprep.mubr.f32.mxu0 %v174
    %266 = vmatmul.mubr.f32.gmra.mrb[0].mxu0 %v166
    %v267 = vpop.f32.mrb[0].mxu0
    %v268 = vadd.f32 0.0, %v267
    %v269 = vpop.f32.mrb[0].mxu0
    %270 = vdwg.mxu0
    %271 = vmatprep.subr.mxu0 0.0
    %272 = vmatpush1.msra.mxu0 %v58
    %273 = vmatprep.subr.mxu0 0.0
    %274 = vmatpush1.msra.mxu0 %v59
    %275 = vmatprep.subr.mxu0 0.0
    %276 = vmatpush1.msra.mxu0 %v60
    %277 = vmatprep.subr.mxu0 0.0
    %278 = vmatpush1.msra.mxu0 %v61
    %279 = vmatprep.subr.mxu0 0.0
    %280 = vmatpush1.msra.mxu0 %v62
    %281 = vmatprep.subr.mxu0 0.0
    %282 = vmatpush1.msra.mxu0 %v63
    %283 = vmatprep.subr.mxu0 0.0
    %284 = vmatpush1.msra.mxu0 %v64
    %285 = vmatprep.subr.mxu0 0.0
    %286 = vmatpush1.msra.mxu0 %v65
    %287 = vmatprep.subr.mxu0 0.0
    %288 = vmatpush1.msra.mxu0 %v66
    %289 = vmatprep.subr.mxu0 0.0
    %290 = vmatpush1.msra.mxu0 %v67
    %291 = vmatprep.subr.mxu0 0.0
    %292 = vmatpush1.msra.mxu0 %v68
    %293 = vmatprep.subr.mxu0 0.0
    %294 = vmatpush1.msra.mxu0 %v69
    %295 = vmatprep.subr.mxu0 0.0
    %296 = vmatpush1.msra.mxu0 %v70
    %297 = vmatprep.subr.mxu0 0.0
    %298 = vmatpush1.msra.mxu0 %v71
    %299 = vmatprep.subr.mxu0 0.0
    %300 = vmatpush1.msra.mxu0 %v72
    %301 = vmatprep.subr.mxu0 0.0
    %302 = vmatpush1.msra.mxu0 %v73
    %303 = vmatprep.subr.mxu0 0.0
    %304 = vmatpush1.msra.mxu0 %v74
    %305 = vmatprep.subr.mxu0 0.0
    %306 = vmatpush1.msra.mxu0 %v75
    %307 = vmatprep.subr.mxu0 0.0
    %308 = vmatpush1.msra.mxu0 %v76
    %309 = vmatprep.subr.mxu0 0.0
    %310 = vmatpush1.msra.mxu0 %v77
    %311 = vmatprep.subr.mxu0 0.0
    %312 = vmatpush1.msra.mxu0 %v78
    %313 = vmatprep.subr.mxu0 0.0
    %314 = vmatpush1.msra.mxu0 %v79
    %315 = vmatprep.subr.mxu0 0.0
    %316 = vmatpush1.msra.mxu0 %v80
    %317 = vmatprep.subr.mxu0 0.0
    %318 = vmatpush1.msra.mxu0 %v81
    %319 = vmatprep.subr.mxu0 0.0
    %320 = vmatpush1.msra.mxu0 %v82
    %321 = vmatprep.subr.mxu0 0.0
    %322 = vmatpush1.msra.mxu0 %v83
    %323 = vmatprep.subr.mxu0 0.0
    %324 = vmatpush1.msra.mxu0 %v84
    %325 = vmatprep.subr.mxu0 0.0
    %326 = vmatpush1.msra.mxu0 %v85
    %327 = vmatprep.subr.mxu0 0.0
    %328 = vmatpush1.msra.mxu0 %v86
    %329 = vmatprep.subr.mxu0 0.0
    %330 = vmatpush1.msra.mxu0 %v87
    %331 = vmatprep.subr.mxu0 0.0
    %332 = vmatpush1.msra.mxu0 %v88
    %333 = vmatprep.subr.mxu0 0.0
    %334 = vmatpush1.msra.mxu0 %v89
    %335 = vmatprep.mubr.f32.mxu0 %v175
    %336 = vmatmul.mubr.f32.gmra.mrb[0].mxu0 %v173
    %v337 = vpop.f32.mrb[0].mxu0
    %v338 = vadd.f32 %v268, %v337
    %v339 = vpop.f32.mrb[0].mxu0
    %340 = vdwg.mxu0
    %341 = vmatprep.subr.mxu0 0.0
    %342 = vmatpush1.msra.mxu0 %v90
    %343 = vmatprep.subr.mxu0 0.0
    %344 = vmatpush1.msra.mxu0 %v91
    %345 = vmatprep.subr.mxu0 0.0
    %346 = vmatpush1.msra.mxu0 %v92
    %347 = vmatprep.subr.mxu0 0.0
    %348 = vmatpush1.msra.mxu0 %v93
    %349 = vmatprep.subr.mxu0 0.0
    %350 = vmatpush1.msra.mxu0 %v94
    %351 = vmatprep.subr.mxu0 0.0
    %352 = vmatpush1.msra.mxu0 %v95
    %353 = vmatprep.subr.mxu0 0.0
    %354 = vmatpush1.msra.mxu0 %v96
    %355 = vmatprep.subr.mxu0 0.0
    %356 = vmatpush1.msra.mxu0 %v97
    %357 = vmatprep.subr.mxu0 0.0
    %358 = vmatpush1.msra.mxu0 %v98
    %359 = vmatprep.subr.mxu0 0.0
    %360 = vmatpush1.msra.mxu0 %v99
    %361 = vmatprep.subr.mxu0 0.0
    %362 = vmatpush1.msra.mxu0 %v100
    %363 = vmatprep.subr.mxu0 0.0
    %364 = vmatpush1.msra.mxu0 %v101
    %365 = vmatprep.subr.mxu0 0.0
    %366 = vmatpush1.msra.mxu0 %v102
    %367 = vmatprep.subr.mxu0 0.0
    %368 = vmatpush1.msra.mxu0 %v103
    %369 = vmatprep.subr.mxu0 0.0
    %370 = vmatpush1.msra.mxu0 %v104
    %371 = vmatprep.subr.mxu0 0.0
    %372 = vmatpush1.msra.mxu0 %v105
    %373 = vmatprep.subr.mxu0 0.0
    %374 = vmatpush1.msra.mxu0 %v106
    %375 = vmatprep.subr.mxu0 0.0
    %376 = vmatpush1.msra.mxu0 %v107
    %377 = vmatprep.subr.mxu0 0.0
    %378 = vmatpush1.msra.mxu0 %v108
    %379 = vmatprep.subr.mxu0 0.0
    %380 = vmatpush1.msra.mxu0 %v109
    %381 = vmatprep.subr.mxu0 0.0
    %382 = vmatpush1.msra.mxu0 %v110
    %383 = vmatprep.subr.mxu0 0.0
    %384 = vmatpush1.msra.mxu0 %v111
    %385 = vmatprep.subr.mxu0 0.0
    %386 = vmatpush1.msra.mxu0 %v112
    %387 = vmatprep.subr.mxu0 0.0
    %388 = vmatpush1.msra.mxu0 %v113
    %389 = vmatprep.subr.mxu0 0.0
    %390 = vmatpush1.msra.mxu0 %v114
    %391 = vmatprep.subr.mxu0 0.0
    %392 = vmatpush1.msra.mxu0 %v115
    %393 = vmatprep.subr.mxu0 0.0
    %394 = vmatpush1.msra.mxu0 %v116
    %395 = vmatprep.subr.mxu0 0.0
    %396 = vmatpush1.msra.mxu0 %v117
    %397 = vmatprep.subr.mxu0 0.0
    %398 = vmatpush1.msra.mxu0 %v118
    %399 = vmatprep.subr.mxu0 0.0
    %400 = vmatpush1.msra.mxu0 %v119
    %401 = vmatprep.subr.mxu0 0.0
    %402 = vmatpush1.msra.mxu0 %v120
    %403 = vmatprep.subr.mxu0 0.0
    %404 = vmatpush1.msra.mxu0 %v121
    %405 = vmatprep.mubr.f32.mxu0 %v191
    %406 = vmatmul.mubr.f32.gmra.mrb[0].mxu0 %v183
    %v407 = vpop.f32.mrb[0].mxu0
    %v408 = vadd.f32 %v338, %v407
    %v409 = vpop.f32.mrb[0].mxu0
    %410 = vdwg.mxu0
    %411 = vmatprep.subr.mxu0 0.0
    %412 = vmatpush1.msra.mxu0 %v122
    %413 = vmatprep.subr.mxu0 0.0
    %414 = vmatpush1.msra.mxu0 %v123
    %415 = vmatprep.subr.mxu0 0.0
    %416 = vmatpush1.msra.mxu0 %v124
    %417 = vmatprep.subr.mxu0 0.0
    %418 = vmatpush1.msra.mxu0 %v125
    %419 = vmatprep.subr.mxu0 0.0
    %420 = vmatpush1.msra.mxu0 %v126
    %421 = vmatprep.subr.mxu0 0.0
    %422 = vmatpush1.msra.mxu0 %v127
    %423 = vmatprep.subr.mxu0 0.0
    %424 = vmatpush1.msra.mxu0 %v128
    %425 = vmatprep.subr.mxu0 0.0
    %426 = vmatpush1.msra.mxu0 %v129
    %427 = vmatprep.subr.mxu0 0.0
    %428 = vmatpush1.msra.mxu0 %v130
    %429 = vmatprep.subr.mxu0 0.0
    %430 = vmatpush1.msra.mxu0 %v131
    %431 = vmatprep.subr.mxu0 0.0
    %432 = vmatpush1.msra.mxu0 %v132
    %433 = vmatprep.subr.mxu0 0.0
    %434 = vmatpush1.msra.mxu0 %v133
    %435 = vmatprep.subr.mxu0 0.0
    %436 = vmatpush1.msra.mxu0 %v134
    %437 = vmatprep.subr.mxu0 0.0
    %438 = vmatpush1.msra.mxu0 %v135
    %439 = vmatprep.subr.mxu0 0.0
    %440 = vmatpush1.msra.mxu0 %v136
    %441 = vmatprep.subr.mxu0 0.0
    %442 = vmatpush1.msra.mxu0 %v137
    %443 = vmatprep.subr.mxu0 0.0
    %444 = vmatpush1.msra.mxu0 %v138
    %445 = vmatprep.subr.mxu0 0.0
    %446 = vmatpush1.msra.mxu0 %v139
    %447 = vmatprep.subr.mxu0 0.0
    %448 = vmatpush1.msra.mxu0 %v140
    %449 = vmatprep.subr.mxu0 0.0
    %450 = vmatpush1.msra.mxu0 %v141
    %451 = vmatprep.subr.mxu0 0.0
    %452 = vmatpush1.msra.mxu0 %v142
    %453 = vmatprep.subr.mxu0 0.0
    %454 = vmatpush1.msra.mxu0 %v143
    %455 = vmatprep.subr.mxu0 0.0
    %456 = vmatpush1.msra.mxu0 %v144
    %457 = vmatprep.subr.mxu0 0.0
    %458 = vmatpush1.msra.mxu0 %v145
    %459 = vmatprep.subr.mxu0 0.0
    %460 = vmatpush1.msra.mxu0 %v146
    %461 = vmatprep.subr.mxu0 0.0
    %462 = vmatpush1.msra.mxu0 %v147
    %463 = vmatprep.subr.mxu0 0.0
    %464 = vmatpush1.msra.mxu0 %v148
    %465 = vmatprep.subr.mxu0 0.0
    %466 = vmatpush1.msra.mxu0 %v149
    %467 = vmatprep.subr.mxu0 0.0
    %468 = vmatpush1.msra.mxu0 %v150
    %469 = vmatprep.subr.mxu0 0.0
    %470 = vmatpush1.msra.mxu0 %v151
    %471 = vmatprep.subr.mxu0 0.0
    %472 = vmatpush1.msra.mxu0 %v152
    %473 = vmatprep.subr.mxu0 0.0
    %474 = vmatpush1.msra.mxu0 %v153
    %475 = vmatprep.mubr.f32.mxu0 %v192
    %476 = vmatmul.mubr.f32.gmra.mrb[0].mxu0 %v190
    %v477 = vpop.f32.mrb[0].mxu0
    %v478 = vadd.f32 %v408, %v477
    %v479 = vpop.f32.mrb[0].mxu0
    %480 = vdwg.mxu0
    %v481 = vadd.f32 %v154, %v478
    %vm482 = vcmask 58368
    %483 = vst.msk [vmem:[#allocation2] sm:$0x3] %vm482, %v481
    // Predicated region
    $region22: #{tpu_custom_call.1} parent=1 // pred_check
      %p484 = pneg %p18
    $region23: #{tpu_custom_call.1} parent=1 // pred_check_branch
      %486 = sbr.rel (%p484) target = $region25
    $region24: #{tpu_custom_call.1} parent=1 // pred_region
      %v487 = vld [vmem:[#allocation2] sm:$0x3]
      %v488 = vld [vmem:[%s2] sm:$0x1]
      %v490 = vlaneseq
      %v491 = vshrl.u32 %v490, 7
      %v492 = vsub.s32 0, %v491
      %v493 = vrot.slane %v488, %v492
      %v495 = vadd.f32 %v487, %v493
      %v496 = vsel %vm482, %v495, -inf
      %497 = vmax.xlane.f32.xlu0 %v496
      %v498 = vpop.xlane.xlu0 %497
      %v499 = vsub.f32 %v495, %v498
      %v500 = vmul.f32 %v499, 1.442695
      %v501 = vpow.pop %v500
      %v502 = vsel %vm482, %v501, 0.0
      %503 = vadd.xlane.f32.xlu0 %v502
      %v504 = vpop.xlane.xlu0 %503
      %v505 = vld [vmem:[%s3] sm:$0x1]
      %v507 = vlaneseq
      %v508 = vshrl.u32 %v507, 7
      %v509 = vsub.s32 0, %v508
      %v510 = vrot.slane %v505, %v509
      %v512 = vmul.f32 %v501, %v510
      %v513 = vsel %vm482, %v512, 0.0
      %514 = vadd.xlane.f32.xlu0 %v513
      %v515 = vpop.xlane.xlu0 %514
      %v516 = vsub.f32 %v504, %v515
      %v517 = vlog2.pop %v504
      %v518 = vmul.f32 %v517, 0.6931472
      %v519 = vlog2.pop %v515
      %v520 = vmul.f32 %v519, 0.6931472
      %v521 = vsub.f32 %v520, %v518
      %v522 = vlog2.pop %v516
      %v523 = vmul.f32 %v522, 0.6931472
      %v524 = vsub.f32 %v523, %v518
      %v525 = vlaneseq
      %v526 = vand.u32 %v525, 127
      %vm527 = vcmp.eq.s32.totalorder %v526, 0
      %v528 = vsel %vm527, %v524, %v521
      %vm529 = vcmask 9216
      %530 = vst.msk [vmem:[#allocation3] sm:$0x3] %vm529, %v528
    $region25: #{tpu_custom_call.1} parent=1 // pred_fallthru
      _
    // Predicated region
    $region26: #{tpu_custom_call.1} parent=1 // pred_check
      _
    $region27: #{tpu_custom_call.1} parent=1 // pred_check_branch
      %532 = sbr.rel (0) target = $region29
    $region28: #{tpu_custom_call.1} parent=1 // pred_region
      %s534 = ssub.s32 32, 32
      %535 = vsyncadd [#allocation4], %s534
      %s537 = sshll.u32 [#allocation3], 4
      %s538 = int_to_ptr.vmem [resolvable:$true] %s537
      %540 = dma.vmem_to_hbm [thread:$0]  %s538, 32, %s4, [#allocation4]
    $region29: #{tpu_custom_call.1} parent=1 // pred_fallthru
      _
    // Predicated region
    $region30: #{tpu_custom_call.1} parent=1 // pred_check
      _
    $region31: #{tpu_custom_call.1} parent=1 // pred_check_branch
      %542 = sbr.rel (0) target = $region33
    $region32: #{tpu_custom_call.1} parent=1 // pred_region
      %543 = dma.done [#allocation4], 32
    $region33: #{tpu_custom_call.1} parent=1 // pred_fallthru
      _
    %544 = vsyncpa [#allocation4], 1

</llo_original>
